<compile_context>
chip_gen: v5e
topology: v5e:2x2
jax: 0.10.0
libtpu: 0.0.40
codegen_flags: <defaults>
</compile_context>

<pallas_src>
import functools
import math

import jax
import jax.numpy as jnp
import numpy as np
from jax import lax
from jax.experimental import pallas as pl
from jax.experimental.pallas import tpu as pltpu


# ----------------------------------------------------------------------------
# VMEM / tiling helpers
# ----------------------------------------------------------------------------

def _vmem_capacity_bytes():
    """Physical per-core VMEM, with a conservative fallback (v7x = 64 MiB)."""
    try:
        return int(pltpu.get_tpu_info().vmem_capacity_bytes)
    except Exception:
        return 64 * 1024 * 1024


def _row_quantum(dtype):
    """Sublane packing quantum for the second-to-last block dim."""
    return {4: 8, 2: 16, 1: 32}.get(jnp.dtype(dtype).itemsize, 8)


def _round_up(x, m):
    return ((x + m - 1) // m) * m


def _pick_tile_rows(n_rows, quantum, per_row_pipeline_bytes, per_row_work_bytes,
                    fixed_bytes, budget_bytes, x_row_bytes,
                    target_tile_bytes=2 * 1024 * 1024):
    """Row-tile size from a byte budget (not a fixed row cap).

    per_row_pipeline_bytes : HBM-streamed bytes per row, double-buffer counted.
    per_row_work_bytes     : rough in-kernel f32 working set per row.
    fixed_bytes            : resident blocks (weights, gamma/beta, bias).
    """
    per_row = max(per_row_pipeline_bytes + per_row_work_bytes, 1)
    avail = max(budget_bytes - fixed_bytes, quantum * per_row)
    budget_rows = avail // per_row
    target_rows = max(target_tile_bytes // max(x_row_bytes, 1), quantum)
    tile_r = int(min(budget_rows, target_rows))
    # MXU / layout friendly rounding: multiples of 256 when big, else quantum.
    if tile_r >= 512:
        tile_r = (tile_r // 256) * 256
    tile_r = max(quantum, (tile_r // quantum) * quantum)
    # Never bigger than the (quantum-rounded) problem.
    return min(tile_r, _round_up(n_rows, quantum))


# ----------------------------------------------------------------------------
# Kernels
# ----------------------------------------------------------------------------

def _layernorm_kernel(x_ref, g_ref, b_ref, o_ref, *, eps):
    # x_ref: (tile_r, D); g_ref/b_ref: (1, D); o_ref: (tile_r, D)
    x = x_ref[...].astype(jnp.float32)
    mean = jnp.mean(x, axis=-1, keepdims=True)
    meansq = jnp.mean(x * x, axis=-1, keepdims=True)
    var = meansq - mean * mean                      # single-pass: one less live temp
    inv = lax.rsqrt(var + eps)                      # EUP, f32
    y = (x - mean) * (inv * g_ref[...].astype(jnp.float32)) \
        + b_ref[...].astype(jnp.float32)
    o_ref[...] = y.astype(o_ref.dtype)


def _prenorm_linear_kernel(x_ref, g_ref, b_ref, w_ref, fb_ref, o_ref, *, eps):
    # x_ref: (tile_r, D); g/b: (1, D); w_ref: (D, D_out) bf16; fb_ref: (1, D_out)
    x = x_ref[...].astype(jnp.float32)
    mean = jnp.mean(x, axis=-1, keepdims=True)
    meansq = jnp.mean(x * x, axis=-1, keepdims=True)
    var = meansq - mean * mean
    inv = lax.rsqrt(var + eps)
    y = (x - mean) * (inv * g_ref[...].astype(jnp.float32)) \
        + b_ref[...].astype(jnp.float32)
    # MXU consumes the normalized tile straight from VMEM (bf16 single-pass).
    acc = jnp.dot(y.astype(jnp.bfloat16), w_ref[...],
                  preferred_element_type=jnp.float32)
    o_ref[...] = (acc + fb_ref[...].astype(jnp.float32)).astype(o_ref.dtype)


# ----------------------------------------------------------------------------
# Wrappers
# ----------------------------------------------------------------------------

def layernorm_pallas(x, gamma, beta, *, eps=1e-5):
    """LayerNorm over the last dim of x (any leading shape), PyTorch semantics."""
    # TODO(synk): for D < 128 fold k = 128 // D rows into the lane dim (segmented
    # reductions) to keep stores lane-dense; current kernel is correct but masked.
    orig_shape = x.shape
    D = orig_shape[-1]
    R = int(np.prod(orig_shape[:-1])) if len(orig_shape) > 1 else 1
    x2 = x.reshape(R, D)
    g2 = gamma.reshape(1, D)
    b2 = beta.reshape(1, D)

    isz = jnp.dtype(x.dtype).itemsize
    quantum = _row_quantum(x.dtype)
    vmem_cap = _vmem_capacity_bytes()
    budget = vmem_cap // 2                  # pipeline buffers <= 50% of physical
    vmem_limit = (vmem_cap * 3) // 4        # headroom for internal scratch

    tile_r = _pick_tile_rows(
        n_rows=R, quantum=quantum,
        per_row_pipeline_bytes=2 * (D * isz + D * isz),   # 2 bufs x (in + out)
        per_row_work_bytes=2 * D * 4,                     # f32 working set
        fixed_bytes=4 * D * 4,                            # gamma/beta
        budget_bytes=budget,
        x_row_bytes=D * isz,
    )
    grid = (pl.cdiv(R, tile_r),)

    cost = pl.CostEstimate(
        flops=8 * R * D,
        transcendentals=R,
        bytes_accessed=2 * R * D * isz + 2 * D * 4,
    )

    out = pl.pallas_call(
        functools.partial(_layernorm_kernel, eps=eps),
        out_shape=jax.ShapeDtypeStruct((R, D), x.dtype),
        grid_spec=pltpu.PrefetchScalarGridSpec(
            num_scalar_prefetch=0,
            grid=grid,
            in_specs=[
                pl.BlockSpec((tile_r, D), lambda i: (i, 0)),
                pl.BlockSpec((1, D), lambda i: (0, 0)),
                pl.BlockSpec((1, D), lambda i: (0, 0)),
            ],
            out_specs=pl.BlockSpec((tile_r, D), lambda i: (i, 0)),
        ),
        compiler_params=pltpu.CompilerParams(
            dimension_semantics=("parallel",),
            vmem_limit_bytes=vmem_limit,
        ),
        cost_estimate=cost,
    )(x2, g2, b2)
    return out.reshape(orig_shape)


def prenorm_linear_pallas(x, gamma, beta, w, bias, *, eps=1e-5):
    """Fused PreNorm + Linear: LayerNorm(x) @ w + bias, with w of shape (D, D_out)."""
    orig_shape = x.shape
    D = orig_shape[-1]
    D_out = w.shape[-1]
    R = int(np.prod(orig_shape[:-1])) if len(orig_shape) > 1 else 1

    isz = jnp.dtype(x.dtype).itemsize
    osz = isz
    wsz = 2  # weights held as bf16 (MXU-native single pass)
    quantum = _row_quantum(x.dtype)
    vmem_cap = _vmem_capacity_bytes()
    budget = vmem_cap // 2
    vmem_limit = (vmem_cap * 3) // 4

    fixed = 2 * (D * D_out * wsz) + (2 * D + D_out) * 4 * 2
    if fixed > budget // 2:
        # Weight block too large to hold resident: fall back to the unfused path.
        # TODO(synk): tile the Linear over a D_out grid axis for very large fan-out.
        y = layernorm_pallas(x, gamma, beta, eps=eps)
        out = (jnp.dot(y.astype(jnp.bfloat16), w.astype(jnp.bfloat16),
                       preferred_element_type=jnp.float32)
               + bias.astype(jnp.float32)).astype(x.dtype)
        return out

    tile_r = _pick_tile_rows(
        n_rows=R, quantum=quantum,
        per_row_pipeline_bytes=2 * (D * isz + D_out * osz),
        per_row_work_bytes=(2 * D + D_out) * 4,
        fixed_bytes=fixed,
        budget_bytes=budget,
        x_row_bytes=D * isz,
    )
    grid = (pl.cdiv(R, tile_r),)

    x2 = x.reshape(R, D)
    g2 = gamma.reshape(1, D)
    b2 = beta.reshape(1, D)
    w2 = w.astype(jnp.bfloat16).reshape(D, D_out)
    fb2 = bias.reshape(1, D_out)

    cost = pl.CostEstimate(
        flops=2 * R * D * D_out + 8 * R * D,
        transcendentals=R,
        bytes_accessed=R * D * isz + R * D_out * osz + D * D_out * wsz
        + (2 * D + D_out) * 4,
    )

    out = pl.pallas_call(
        functools.partial(_prenorm_linear_kernel, eps=eps),
        out_shape=jax.ShapeDtypeStruct((R, D_out), x.dtype),
        grid_spec=pltpu.PrefetchScalarGridSpec(
            num_scalar_prefetch=0,
            grid=grid,
            in_specs=[
                pl.BlockSpec((tile_r, D), lambda i: (i, 0)),
                pl.BlockSpec((1, D), lambda i: (0, 0)),
                pl.BlockSpec((1, D), lambda i: (0, 0)),
                pl.BlockSpec((D, D_out), lambda i: (0, 0)),   # resident weight
                pl.BlockSpec((1, D_out), lambda i: (0, 0)),
            ],
            out_specs=pl.BlockSpec((tile_r, D_out), lambda i: (i, 0)),
        ),
        compiler_params=pltpu.CompilerParams(
            dimension_semantics=("parallel",),
            vmem_limit_bytes=vmem_limit,
        ),
        cost_estimate=cost,
    )(x2, g2, b2, w2, fb2)
    return out.reshape(orig_shape[:-1] + (D_out,))


def prenorm_forward(x, gamma, beta, fn, *, eps=1e-5):
    """Generic PreNorm.forward: fn(LayerNorm(x)) for an arbitrary callable fn."""
    # TODO(synk): only the statically-known Linear fn is fused (see
    # prenorm_linear_pallas); arbitrary fns are applied outside the kernel.
    return fn(layernorm_pallas(x, gamma, beta, eps=eps))


# ----------------------------------------------------------------------------
# Pure-JAX references (PyTorch semantics)
# ----------------------------------------------------------------------------

def layernorm_ref(x, gamma, beta, *, eps=1e-5):
    xf = x.astype(jnp.float32)
    mean = jnp.mean(xf, axis=-1, keepdims=True)
    xc = xf - mean
    var = jnp.mean(xc * xc, axis=-1, keepdims=True)
    y = xc * lax.rsqrt(var + eps) * gamma.astype(jnp.float32) \
        + beta.astype(jnp.float32)
    return y.astype(x.dtype)


def prenorm_ref(x, gamma, beta, fn, *, eps=1e-5):
    return fn(layernorm_ref(x, gamma, beta, eps=eps))


# ----------------------------------------------------------------------------
# Demo / self-test
# ----------------------------------------------------------------------------

if __name__ == "__main__":
    key = jax.random.PRNGKey(0)
    B, N, D = 2, 8, 128          # (batch, seq, dim) — lane-dense feature dim
    D_out = 128

    k0, k1, k2, k3, k4 = jax.random.split(key, 5)
    x = jax.random.normal(k0, (B, N, D), jnp.float32)
    gamma = 1.0 + 0.1 * jax.random.normal(k1, (D,), jnp.float32)
    beta = 0.1 * jax.random.normal(k2, (D,), jnp.float32)

    # Example `fn`: a Linear layer. w_fn: (D, D_out), b_fn: (D_out,).
    w_fn = jax.random.normal(k3, (D, D_out), jnp.float32) * (1.0 / math.sqrt(D))
    b_fn = 0.05 * jax.random.normal(k4, (D_out,), jnp.float32)
    w_bf16 = w_fn.astype(jnp.bfloat16)

    def fn(y):  # same bf16-MXU math as the fused kernel
        return (jnp.dot(y.astype(jnp.bfloat16), w_bf16,
                        preferred_element_type=jnp.float32) + b_fn).astype(y.dtype)

    # 1) Standalone LayerNorm kernel (tight tolerance).
    ln_out = jax.block_until_ready(layernorm_pallas(x, gamma, beta))
    ln_exp = layernorm_ref(x, gamma, beta)
    np.testing.assert_allclose(np.asarray(ln_out), np.asarray(ln_exp),
                               rtol=1e-4, atol=1e-4)

    # 2) Fused PreNorm + Linear kernel (bf16 matmul tolerance).
    fused = jax.block_until_ready(prenorm_linear_pallas(x, gamma, beta, w_fn, b_fn))
    expect = prenorm_ref(x, gamma, beta, fn)
    np.testing.assert_allclose(np.asarray(fused), np.asarray(expect),
                               rtol=2e-3, atol=2e-3)

    # 3) Generic (unfused) path with the same fn.
    generic = jax.block_until_ready(prenorm_forward(x, gamma, beta, fn))
    np.testing.assert_allclose(np.asarray(generic), np.asarray(expect),
                               rtol=2e-3, atol=2e-3)

    print("KERNEL_OK")
</pallas_src>

<mosaic_0001>
module attributes {stable_mosaic.version = 11 : i64} {
  func.func @_layernorm_kernel(%arg0: i32, %arg1: memref<16x128xf32, #tpu.memory_space<vmem>>, %arg2: memref<1x128xf32, #tpu.memory_space<vmem>>, %arg3: memref<1x128xf32, #tpu.memory_space<vmem>>, %arg4: memref<16x128xf32, #tpu.memory_space<vmem>>) attributes {dimension_semantics = [#tpu.dimension_semantics<parallel>], iteration_bounds = array<i64: 1>, scalar_prefetch = 0 : i64, scratch_operands = 0 : i64, tpu.core_type = #tpu.core_type<tc>, window_params = [{transform_indices = @transform_0, window_bounds = array<i64: 16, 128>}, {pipeline_mode = #tpu.pipeline_mode<synchronous>, transform_indices = @transform_1, window_bounds = array<i64: 1, 128>}, {pipeline_mode = #tpu.pipeline_mode<synchronous>, transform_indices = @transform_2, window_bounds = array<i64: 1, 128>}, {transform_indices = @transform_3, window_bounds = array<i64: 16, 128>}]} {
    %c0 = arith.constant 0 : index
    %c0_0 = arith.constant 0 : index
    %0 = vector.load %arg1[%c0, %c0_0] : memref<16x128xf32, #tpu.memory_space<vmem>>, vector<16x128xf32>
    %cst = arith.constant dense<0.000000e+00> : vector<16xf32>
    %1 = vector.multi_reduction <add>, %0, %cst [1] : vector<16x128xf32> to vector<16xf32>
    %2 = vector.shape_cast %1 : vector<16xf32> to vector<16x1xf32>
    %cst_1 = arith.constant 1.280000e+02 : f32
    %3 = vector.broadcast %cst_1 : f32 to vector<16x1xf32>
    %4 = arith.divf %2, %3 : vector<16x1xf32>
    %5 = arith.mulf %0, %0 : vector<16x128xf32>
    %cst_2 = arith.constant dense<0.000000e+00> : vector<16xf32>
    %6 = vector.multi_reduction <add>, %5, %cst_2 [1] : vector<16x128xf32> to vector<16xf32>
    %7 = vector.shape_cast %6 : vector<16xf32> to vector<16x1xf32>
    %cst_3 = arith.constant 1.280000e+02 : f32
    %8 = vector.broadcast %cst_3 : f32 to vector<16x1xf32>
    %9 = arith.divf %7, %8 : vector<16x1xf32>
    %10 = arith.mulf %4, %4 : vector<16x1xf32>
    %11 = arith.subf %9, %10 : vector<16x1xf32>
    %cst_4 = arith.constant 9.99999974E-6 : f32
    %12 = vector.broadcast %cst_4 : f32 to vector<16x1xf32>
    %13 = arith.addf %11, %12 : vector<16x1xf32>
    %14 = math.rsqrt %13 : vector<16x1xf32>
    %15 = vector.broadcast %4 : vector<16x1xf32> to vector<16x128xf32>
    %16 = arith.subf %0, %15 : vector<16x128xf32>
    %c0_5 = arith.constant 0 : index
    %c0_6 = arith.constant 0 : index
    %17 = vector.load %arg2[%c0_5, %c0_6] : memref<1x128xf32, #tpu.memory_space<vmem>>, vector<1x128xf32>
    %18 = vector.broadcast %14 : vector<16x1xf32> to vector<16x128xf32>
    %19 = vector.broadcast %17 : vector<1x128xf32> to vector<16x128xf32>
    %20 = arith.mulf %18, %19 : vector<16x128xf32>
    %21 = arith.mulf %16, %20 : vector<16x128xf32>
    %c0_7 = arith.constant 0 : index
    %c0_8 = arith.constant 0 : index
    %22 = vector.load %arg3[%c0_7, %c0_8] : memref<1x128xf32, #tpu.memory_space<vmem>>, vector<1x128xf32>
    %23 = vector.broadcast %22 : vector<1x128xf32> to vector<16x128xf32>
    %24 = arith.addf %21, %23 : vector<16x128xf32>
    %c0_9 = arith.constant 0 : index
    %c0_10 = arith.constant 0 : index
    %25 = vector.load %arg4[%c0_9, %c0_10] : memref<16x128xf32, #tpu.memory_space<vmem>>, vector<16x128xf32>
    tpu.vector_store %arg4[%c0_9, %c0_10], %24 {strides = array<i32>} : memref<16x128xf32, #tpu.memory_space<vmem>>, vector<16x128xf32>,
    return
  }
  func.func @transform_0(%arg0: i32) -> (i32, i32) {
    %c0_i32 = arith.constant 0 : i32
    %c0_i32_0 = arith.constant 0 : i32
    return %arg0, %c0_i32 : i32, i32
  }
  func.func @transform_1(%arg0: i32) -> (i32, i32) {
    %c0_i32 = arith.constant 0 : i32
    %c0_i32_0 = arith.constant 0 : i32
    %c0_i32_1 = arith.constant 0 : i32
    return %c0_i32, %c0_i32_0 : i32, i32
  }
  func.func @transform_2(%arg0: i32) -> (i32, i32) {
    %c0_i32 = arith.constant 0 : i32
    %c0_i32_0 = arith.constant 0 : i32
    %c0_i32_1 = arith.constant 0 : i32
    return %c0_i32, %c0_i32_0 : i32, i32
  }
  func.func @transform_3(%arg0: i32) -> (i32, i32) {
    %c0_i32 = arith.constant 0 : i32
    %c0_i32_0 = arith.constant 0 : i32
    return %arg0, %c0_i32 : i32, i32
  }
}

</mosaic_0001>

<llo_original>
// kernel: tpu_custom_call.1
$region0: #{tpu_custom_call.1}
  #allocation0 [shape = 'u32[]', space=smem, size = 0x4, offset = 0x4, fixed_abs, tag = 'smem constant byte address 0x4 - core index']
  #allocation1 [shape = 'u32[72,128]{1,0:T(1,128)}', space=vmem, size = 0x9000, scoped, tag = 'internal scratch']
  %s0 = inlined_call_operand.hbm [shape: f32[16,128], index: 0, kind: input, shape index: {}]
  %s1 = inlined_call_operand.hbm [shape: f32[1,128], index: 1, kind: input, shape index: {}]
  %s2 = inlined_call_operand.vmem [shape: f32[1,128], index: 2, kind: input, shape index: {}]
  %s3 = inlined_call_operand.hbm [shape: f32[16,128], index: 3, kind: output, shape index: {}]
  %s4 = sld [smem:[#allocation0]]
  $region30: #{tpu_custom_call.1} parent=0
    _
  %s6 = ssub.s32 1, %s4
  %s7 = scalar_select 0, %s6, %s4
  $region1: #{tpu_custom_call.1} parent=0
    #allocation2 [shape = 'u8[8192]{0}', space=vmem, size = 0x2000, scoped, tag = 'input window, operand 0, single buffered']
    #allocation3 [shape = 's32[1]{0}', space=sflag, size = 0x4, scoped, tag = 'scoped memory for tpu_custom_call.1']
    #allocation4 [shape = 's32[1]{0}', space=sflag, size = 0x4, scoped, tag = 'scoped memory for tpu_custom_call.1']
    #allocation5 [shape = 'u8[512]{0}', space=vmem, size = 0x400, scoped, tag = 'input window, operand 1, single buffered']
    #allocation6 [shape = 's32[1]{0}', space=sflag, size = 0x4, scoped, tag = 'scoped memory for tpu_custom_call.1']
    #allocation7 [shape = 'u8[8192]{0}', space=vmem, size = 0x2000, scoped, tag = 'output window, operand 0, single buffered']
    %8 = vsyncpa [#allocation3], 0
    %9 = vsyncpa [#allocation6], 0
    %10 = vsyncpa [#allocation4], 0
    // Predicated region
    $region2: #{tpu_custom_call.1} parent=1 // pred_check
      _
    $region3: #{tpu_custom_call.1} parent=1 // pred_check_branch
      %12 = sbr.rel (0) target = $region5
    $region4: #{tpu_custom_call.1} parent=1 // pred_region
      %14 = vsyncadd [#allocation3], 0
      %s15 = sshll.u32 %s0, 4
      %s16 = int_to_ptr.hbm [resolvable:$true] %s15
      %s17 = sshll.u32 [#allocation2], 4
      %s18 = int_to_ptr.vmem [resolvable:$true] %s17
      %23 = dma.hbm_to_vmem [thread:$0]  %s16, 256, %s18, [#allocation3], 128, 128, 8
    $region5: #{tpu_custom_call.1} parent=1 // pred_fallthru
      _
    // Predicated region
    $region6: #{tpu_custom_call.1} parent=1 // pred_check
      _
    $region7: #{tpu_custom_call.1} parent=1 // pred_check_branch
      %25 = sbr.rel (0) target = $region9
    $region8: #{tpu_custom_call.1} parent=1 // pred_region
      %27 = vsyncadd [#allocation6], 0
      %s29 = sshll.u32 %s1, 4
      %s30 = int_to_ptr.hbm [resolvable:$true] %s29
      %s31 = sshll.u32 [#allocation5], 4
      %s32 = int_to_ptr.vmem [resolvable:$true] %s31
      %34 = dma.hbm_to_vmem [thread:$0]  %s30, 16, %s32, [#allocation6]
    $region9: #{tpu_custom_call.1} parent=1 // pred_fallthru
      _
    // Predicated region
    $region10: #{tpu_custom_call.1} parent=1 // pred_check
      _
    $region11: #{tpu_custom_call.1} parent=1 // pred_check_branch
      %36 = sbr.rel (0) target = $region13
    $region12: #{tpu_custom_call.1} parent=1 // pred_region
      _
    $region13: #{tpu_custom_call.1} parent=1 // pred_fallthru
      _
    // Predicated region
    $region14: #{tpu_custom_call.1} parent=1 // pred_check
      _
    $region15: #{tpu_custom_call.1} parent=1 // pred_check_branch
      %38 = sbr.rel (0) target = $region17
    $region16: #{tpu_custom_call.1} parent=1 // pred_region
      %40 = dma.done [#allocation3], 256
    $region17: #{tpu_custom_call.1} parent=1 // pred_fallthru
      _
    // Predicated region
    $region18: #{tpu_custom_call.1} parent=1 // pred_check
      _
    $region19: #{tpu_custom_call.1} parent=1 // pred_check_branch
      %42 = sbr.rel (0) target = $region21
    $region20: #{tpu_custom_call.1} parent=1 // pred_region
      %44 = dma.done [#allocation6], 16
    $region21: #{tpu_custom_call.1} parent=1 // pred_fallthru
      _
    %v45 = vld [vmem:[#allocation2] sm:$0xff]
    %v46 = vld [vmem:[#allocation2 + $0x8] sm:$0xff]
    %47 = vadd.xlane.f32.xlu0 %v45
    %v48 = vpop.xlane.xlu0 %47
    %49 = vadd.xlane.f32.xlu0 %v46
    %v50 = vpop.xlane.xlu0 %49
    %v51 = vrcp.pop 128.0
    %v52 = vmul.f32 128.0, %v51
    %v53 = vsub.f32 1.0, %v52
    %v54 = vmul.f32 %v51, %v53
    %v55 = vadd.f32 %v51, %v54
    %vm56 = vweird.f32 %v51
    %v57 = vsel %vm56, %v51, %v55
    %v58 = vmul.f32 %v48, %v57
    %v59 = vmul.f32 %v50, %v57
    %v60 = vmul.f32 %v45, %v45
    %v61 = vmul.f32 %v46, %v46
    %62 = vadd.xlane.f32.xlu0 %v60
    %v63 = vpop.xlane.xlu0 %62
    %64 = vadd.xlane.f32.xlu0 %v61
    %v65 = vpop.xlane.xlu0 %64
    %v66 = vmul.f32 %v63, %v57
    %v67 = vmul.f32 %v65, %v57
    %v68 = vmul.f32 %v58, %v58
    %v69 = vmul.f32 %v59, %v59
    %v70 = vsub.f32 %v66, %v68
    %v71 = vsub.f32 %v67, %v69
    %v72 = vadd.f32 %v70, 1e-05
    %v73 = vadd.f32 %v71, 1e-05
    %v74 = vrsqrt.pop %v72
    %v75 = vmul.f32 %v74, %v72
    %v76 = vmul.f32 %v75, %v74
    %v77 = vmul.f32 0.5, %v76
    %v78 = vsub.f32 1.5, %v77
    %v79 = vmul.f32 %v74, %v78
    %vm80 = vweird.f32 %v72
    %vm81 = vweird.f32 %v74
    %vm82 = vmor %vm80, %vm81
    %v83 = vsel %vm82, %v74, %v79
    %v84 = vrsqrt.pop %v73
    %v85 = vmul.f32 %v84, %v73
    %v86 = vmul.f32 %v85, %v84
    %v87 = vmul.f32 0.5, %v86
    %v88 = vsub.f32 1.5, %v87
    %v89 = vmul.f32 %v84, %v88
    %vm90 = vweird.f32 %v73
    %vm91 = vweird.f32 %v84
    %vm92 = vmor %vm90, %vm91
    %v93 = vsel %vm92, %v84, %v89
    %v94 = vsub.f32 %v45, %v58
    %v95 = vsub.f32 %v46, %v59
    %v96 = vld [vmem:[#allocation5] sm:$0x1]
    %v98 = vperm.slane %v96, 0
    %v100 = vmul.f32 %v83, %v98
    %v101 = vmul.f32 %v93, %v98
    %v102 = vmul.f32 %v94, %v100
    %v103 = vmul.f32 %v95, %v101
    %v104 = vld [vmem:[%s2] sm:$0x1]
    %v106 = vperm.slane %v104, 0
    %v108 = vadd.f32 %v102, %v106
    %v109 = vadd.f32 %v103, %v106
    %110 = vst [vmem:[#allocation7] sm:$0xff] %v108
    %111 = vst [vmem:[#allocation7 + $0x8] sm:$0xff] %v109
    // Predicated region
    $region22: #{tpu_custom_call.1} parent=1 // pred_check
      _
    $region23: #{tpu_custom_call.1} parent=1 // pred_check_branch
      %113 = sbr.rel (0) target = $region25
    $region24: #{tpu_custom_call.1} parent=1 // pred_region
      %115 = vsyncadd [#allocation4], 0
      %s116 = sshll.u32 [#allocation7], 4
      %s117 = int_to_ptr.vmem [resolvable:$true] %s116
      %s118 = sshll.u32 %s3, 4
      %s119 = int_to_ptr.hbm [resolvable:$true] %s118
      %124 = dma.vmem_to_hbm [thread:$0]  %s117, 256, %s119, [#allocation4], 128, 128, 8
    $region25: #{tpu_custom_call.1} parent=1 // pred_fallthru
      _
    // Predicated region
    $region26: #{tpu_custom_call.1} parent=1 // pred_check
      _
    $region27: #{tpu_custom_call.1} parent=1 // pred_check_branch
      %126 = sbr.rel (0) target = $region29
    $region28: #{tpu_custom_call.1} parent=1 // pred_region
      %128 = dma.done [#allocation4], 256
    $region29: #{tpu_custom_call.1} parent=1 // pred_fallthru
      _
    %129 = vsyncpa [#allocation3], 1
    %130 = vsyncpa [#allocation6], 1
    %131 = vsyncpa [#allocation4], 1

</llo_original>
